<compile_context>
chip_gen: v5e
topology: v5e:2x2
jax: 0.10.0
libtpu: 0.0.40
codegen_flags: <defaults>
</compile_context>

<pallas_src>
import functools

import jax
import jax.numpy as jnp
from jax.experimental import pallas as pl
from jax.experimental.pallas import tpu as pltpu


def _hsigmoid_kernel(x_ref, o_ref):
    x = x_ref[...]
    # relu6(x + 3) / 6  == clamp(x + 3, 0, 6) * (1/6)
    y = jnp.clip(x + 3.0, 0.0, 6.0) * (1.0 / 6.0)
    o_ref[...] = y.astype(o_ref.dtype)


# Whole-slab single-block fast path threshold (review: keep <= 1 MiB so the
# pipelined path can overlap read/compute/write for anything bigger).
_SINGLE_BLOCK_MAX_BYTES = 1 << 20


@functools.lru_cache(maxsize=1)
def _chip_config():
    """Returns (target_block_bytes, two_tensorcores) tuned per TPU generation."""
    vmem_bytes = 128 << 20
    try:
        info = pltpu.get_tpu_info()
        vmem_bytes = int(getattr(info, "vmem_capacity_bytes", vmem_bytes) or vmem_bytes)
    except Exception:
        pass
    if vmem_bytes <= (96 << 20):
        # v7x: 64 MiB VMEM per TC, 3.2 TB/s HBM, 2 TensorCores.
        return 8 << 20, True
    # v5e / v6e: 128 MiB VMEM, single TensorCore.
    return 4 << 20, False


def _round_up(v, m):
    return -(-v // m) * m


def _choose_tile_rows(rows, row_bytes, sublane, target_block_bytes, two_cores):
    tr = max(sublane, (target_block_bytes // row_bytes) // sublane * sublane)
    # Keep enough grid steps to overlap in-DMA / compute / out-DMA, and on v7x
    # give both TensorCores work.
    min_steps = 4 if two_cores else 2
    tr = min(tr, _round_up(pl.cdiv(rows, min_steps), sublane))
    tr = max(tr, sublane)
    if two_cores:
        # Balance the "parallel" axis across the two TensorCores: even grid.
        steps = pl.cdiv(rows, tr)
        if steps > 1 and steps % 2 == 1:
            tr = max(sublane, _round_up(pl.cdiv(rows, steps + 1), sublane))
    return tr


def hsigmoid(x, *, donate: bool = False):
    """Elementwise hard sigmoid: relu6(x + 3) / 6.

    Only pass donate=True if the caller really donates x at the jit boundary
    (donate_argnums); otherwise XLA adds a defensive copy (extra HBM pass).
    """
    orig_shape = x.shape
    orig_dtype = x.dtype
    n = x.size
    if n == 0:
        return x
    itemsize = jnp.dtype(orig_dtype).itemsize
    # Dtype-dependent sublane packing: 8 (f32), 16 (bf16/f16), 32 (int8/fp8).
    sublane = 8 * max(1, 4 // itemsize)

    # Lane-dense last dim; wider lanes => fewer, fatter DMA steps.
    lane = 1024 if n % 1024 == 0 else 128

    x_flat = jnp.ravel(x)
    n_main = (n // lane) * lane
    tail = n - n_main

    if n_main == 0:
        # Tiny ragged tensor (< one lane row): plain jnp, kernel not worth it.
        y = jnp.clip(x_flat + 3.0, 0.0, 6.0) * (1.0 / 6.0)
        return y.astype(orig_dtype).reshape(orig_shape)

    x_main = x_flat[:n_main] if tail else x_flat
    rows = n_main // lane
    x2d = x_main.reshape(rows, lane)  # free reshape of a contiguous array
    slab_bytes = n_main * itemsize

    cost = pl.CostEstimate(
        flops=3 * n_main,
        transcendentals=0,
        bytes_accessed=2 * n_main * itemsize,
    )
    # Aliasing only makes sense when the kernel input IS the caller's buffer.
    io_alias = {0: 0} if (donate and not tail) else {}

    target_block_bytes, two_cores = _chip_config()

    if slab_bytes <= _SINGLE_BLOCK_MAX_BYTES:
        # Small-slab fast path: block shape == full array dims, single step.
        out2d = pl.pallas_call(
            _hsigmoid_kernel,
            out_shape=jax.ShapeDtypeStruct((rows, lane), orig_dtype),
            grid_spec=pltpu.PrefetchScalarGridSpec(
                num_scalar_prefetch=0,
                grid=(1,),
                in_specs=[pl.BlockSpec((rows, lane), lambda i: (0, 0))],
                out_specs=pl.BlockSpec((rows, lane), lambda i: (0, 0)),
            ),
            compiler_params=pltpu.CompilerParams(
                dimension_semantics=("arbitrary",),
            ),
            cost_estimate=cost,
            input_output_aliases=io_alias,
        )(x2d)
    else:
        # Row-tiled, pipelined path with generation-aware fat blocks.
        tile_rows = _choose_tile_rows(
            rows, lane * itemsize, sublane, target_block_bytes, two_cores
        )
        grid = (pl.cdiv(rows, tile_rows),)
        block_bytes = tile_rows * lane * itemsize
        # 2x double-buffered (in + out) + headroom; capped under v7x's 64 MiB.
        vmem_limit = min(4 * block_bytes + (4 << 20), 48 << 20)
        out2d = pl.pallas_call(
            _hsigmoid_kernel,
            out_shape=jax.ShapeDtypeStruct((rows, lane), orig_dtype),
            grid_spec=pltpu.PrefetchScalarGridSpec(
                num_scalar_prefetch=0,
                grid=grid,
                in_specs=[pl.BlockSpec((tile_rows, lane), lambda i: (i, 0))],
                out_specs=pl.BlockSpec((tile_rows, lane), lambda i: (i, 0)),
            ),
            compiler_params=pltpu.CompilerParams(
                dimension_semantics=("parallel",),
                vmem_limit_bytes=vmem_limit,
            ),
            cost_estimate=cost,
            input_output_aliases=io_alias,
        )(x2d)

    out_main = out2d.reshape(-1)
    if tail:
        x_tail = x_flat[n_main:]
        y_tail = (jnp.clip(x_tail + 3.0, 0.0, 6.0) * (1.0 / 6.0)).astype(orig_dtype)
        out_flat = jnp.concatenate([out_main, y_tail])
    else:
        out_flat = out_main
    return out_flat.reshape(orig_shape)


def _ref(x):
    return (jnp.clip(x + 3.0, 0.0, 6.0) * (1.0 / 6.0)).astype(x.dtype)


if __name__ == "__main__":
    key = jax.random.PRNGKey(0)

    # Primary test: small NCHW input consistent with the module's usage.
    x = jax.random.normal(key, (2, 4, 16, 16), dtype=jnp.float32) * 4.0
    y = hsigmoid(x)
    jax.block_until_ready(y)
    assert y.shape == x.shape and y.dtype == x.dtype
    assert jnp.allclose(y, _ref(x), atol=1e-6), "mismatch vs reference (small)"

    k1, k2, k3 = jax.random.split(key, 3)

    # Exercise the tiled / pipelined path (f32 slab > 1 MiB -> multi-step grid).
    x_big = jax.random.normal(k1, (8, 32, 64, 64), dtype=jnp.float32) * 4.0
    y_big = hsigmoid(x_big)
    jax.block_until_ready(y_big)
    assert jnp.allclose(y_big, _ref(x_big), atol=1e-6), "mismatch vs reference (big)"

    # Exercise the tiled path with a sub-32-bit dtype (sublane = 16 for bf16).
    x_bf16 = (jax.random.normal(k3, (8, 32, 64, 64), dtype=jnp.float32) * 4.0).astype(
        jnp.bfloat16
    )
    y_bf16 = hsigmoid(x_bf16)
    jax.block_until_ready(y_bf16)
    assert y_bf16.dtype == jnp.bfloat16
    assert jnp.allclose(
        y_bf16.astype(jnp.float32), _ref(x_bf16).astype(jnp.float32), atol=1e-2
    ), "mismatch vs reference (bf16)"

    # Exercise the ragged (tail) fallback path.
    x_odd = jax.random.normal(k2, (2, 3, 5, 7), dtype=jnp.float32) * 4.0
    y_odd = hsigmoid(x_odd)
    jax.block_until_ready(y_odd)
    assert y_odd.shape == x_odd.shape
    assert jnp.allclose(y_odd, _ref(x_odd), atol=1e-6), "mismatch vs reference (odd)"

    print("KERNEL_OK")
</pallas_src>

<mosaic_0001>
module attributes {stable_mosaic.version = 11 : i64} {
  func.func @_hsigmoid_kernel(%arg0: i32, %arg1: memref<2x1024xf32, #tpu.memory_space<vmem>>, %arg2: memref<2x1024xf32, #tpu.memory_space<vmem>>) attributes {dimension_semantics = [#tpu.dimension_semantics<arbitrary>], iteration_bounds = array<i64: 1>, scalar_prefetch = 0 : i64, scratch_operands = 0 : i64, tpu.core_type = #tpu.core_type<tc>, window_params = [{pipeline_mode = #tpu.pipeline_mode<synchronous>, transform_indices = @transform_0, window_bounds = array<i64: 2, 1024>}, {pipeline_mode = #tpu.pipeline_mode<synchronous>, transform_indices = @transform_1, window_bounds = array<i64: 2, 1024>}]} {
    %c0 = arith.constant 0 : index
    %c0_0 = arith.constant 0 : index
    %0 = vector.load %arg1[%c0, %c0_0] : memref<2x1024xf32, #tpu.memory_space<vmem>>, vector<2x1024xf32>
    %cst = arith.constant 3.000000e+00 : f32
    %1 = vector.broadcast %cst : f32 to vector<2x1024xf32>
    %2 = arith.addf %0, %1 : vector<2x1024xf32>
    %cst_1 = arith.constant 0.000000e+00 : f32
    %cst_2 = arith.constant 6.000000e+00 : f32
    %3 = vector.broadcast %cst_1 : f32 to vector<2x1024xf32>
    %4 = arith.maximumf %3, %2 : vector<2x1024xf32>
    %5 = vector.broadcast %cst_2 : f32 to vector<2x1024xf32>
    %6 = arith.minimumf %5, %4 : vector<2x1024xf32>
    %cst_3 = arith.constant 0.166666672 : f32
    %7 = vector.broadcast %cst_3 : f32 to vector<2x1024xf32>
    %8 = arith.mulf %6, %7 : vector<2x1024xf32>
    %c0_4 = arith.constant 0 : index
    %c0_5 = arith.constant 0 : index
    %9 = vector.load %arg2[%c0_4, %c0_5] : memref<2x1024xf32, #tpu.memory_space<vmem>>, vector<2x1024xf32>
    tpu.vector_store %arg2[%c0_4, %c0_5], %8 {strides = array<i32>} : memref<2x1024xf32, #tpu.memory_space<vmem>>, vector<2x1024xf32>,
    return
  }
  func.func @transform_0(%arg0: i32) -> (i32, i32) {
    %c0_i32 = arith.constant 0 : i32
    %c0_i32_0 = arith.constant 0 : i32
    %c0_i32_1 = arith.constant 0 : i32
    return %c0_i32, %c0_i32_0 : i32, i32
  }
  func.func @transform_1(%arg0: i32) -> (i32, i32) {
    %c0_i32 = arith.constant 0 : i32
    %c0_i32_0 = arith.constant 0 : i32
    %c0_i32_1 = arith.constant 0 : i32
    return %c0_i32, %c0_i32_0 : i32, i32
  }
}

</mosaic_0001>

<llo_original>
// kernel: tpu_custom_call.1
$region0: #{tpu_custom_call.1}
  #allocation0 [shape = 'u32[]', space=smem, size = 0x4, offset = 0x4, fixed_abs, tag = 'smem constant byte address 0x4 - core index']
  #allocation1 [shape = 'u32[72,128]{1,0:T(1,128)}', space=vmem, size = 0x9000, scoped, tag = 'internal scratch']
  %s0 = inlined_call_operand.hbm [shape: f32[2,1024], index: 0, kind: input, shape index: {}]
  %s1 = inlined_call_operand.hbm [shape: f32[2,1024], index: 1, kind: output, shape index: {}]
  %s2 = sld [smem:[#allocation0]]
  $region18: #{tpu_custom_call.1} parent=0
    _
  %s4 = ssub.s32 1, %s2
  %s5 = scalar_select 0, %s4, %s2
  $region1: #{tpu_custom_call.1} parent=0
    #allocation2 [shape = 'u8[8192]{0}', space=vmem, size = 0x2000, scoped, tag = 'input window, operand 0, single buffered']
    #allocation3 [shape = 's32[1]{0}', space=sflag, size = 0x4, scoped, tag = 'scoped memory for tpu_custom_call.1']
    #allocation4 [shape = 's32[1]{0}', space=sflag, size = 0x4, scoped, tag = 'scoped memory for tpu_custom_call.1']
    #allocation5 [shape = 'u8[8192]{0}', space=vmem, size = 0x2000, scoped, tag = 'output window, operand 0, single buffered']
    %6 = vsyncpa [#allocation3], 0
    %7 = vsyncpa [#allocation4], 0
    // Predicated region
    $region2: #{tpu_custom_call.1} parent=1 // pred_check
      _
    $region3: #{tpu_custom_call.1} parent=1 // pred_check_branch
      %9 = sbr.rel (0) target = $region5
    $region4: #{tpu_custom_call.1} parent=1 // pred_region
      %11 = vsyncadd [#allocation3], 0
      %s13 = sshll.u32 %s0, 4
      %s14 = int_to_ptr.hbm [resolvable:$true] %s13
      %s15 = sshll.u32 [#allocation2], 4
      %s16 = int_to_ptr.vmem [resolvable:$true] %s15
      %18 = dma.hbm_to_vmem [thread:$0]  %s14, 256, %s16, [#allocation3]
    $region5: #{tpu_custom_call.1} parent=1 // pred_fallthru
      _
    // Predicated region
    $region6: #{tpu_custom_call.1} parent=1 // pred_check
      _
    $region7: #{tpu_custom_call.1} parent=1 // pred_check_branch
      %20 = sbr.rel (0) target = $region9
    $region8: #{tpu_custom_call.1} parent=1 // pred_region
      %22 = dma.done [#allocation3], 256
    $region9: #{tpu_custom_call.1} parent=1 // pred_fallthru
      _
    %v23 = vld [vmem:[#allocation2] sm:$0xff]
    %v24 = vld [vmem:[#allocation2 + $0x8] sm:$0xff]
    %v25 = vadd.f32 %v23, 3.0
    %v26 = vadd.f32 %v24, 3.0
    %v27 = vmax.f32 %v25, 0.0
    %v28 = vmax.f32 %v26, 0.0
    %v29 = vmin.f32 %v27, 6.0
    %v30 = vmin.f32 %v28, 6.0
    %v31 = vmul.f32 %v29, 0.16666667
    %v32 = vmul.f32 %v30, 0.16666667
    %33 = vst [vmem:[#allocation5] sm:$0xff] %v31
    %34 = vst [vmem:[#allocation5 + $0x8] sm:$0xff] %v32
    // Predicated region
    $region10: #{tpu_custom_call.1} parent=1 // pred_check
      _
    $region11: #{tpu_custom_call.1} parent=1 // pred_check_branch
      %36 = sbr.rel (0) target = $region13
    $region12: #{tpu_custom_call.1} parent=1 // pred_region
      %38 = vsyncadd [#allocation4], 0
      %s40 = sshll.u32 [#allocation5], 4
      %s41 = int_to_ptr.vmem [resolvable:$true] %s40
      %s42 = sshll.u32 %s1, 4
      %s43 = int_to_ptr.hbm [resolvable:$true] %s42
      %45 = dma.vmem_to_hbm [thread:$0]  %s41, 256, %s43, [#allocation4]
    $region13: #{tpu_custom_call.1} parent=1 // pred_fallthru
      _
    // Predicated region
    $region14: #{tpu_custom_call.1} parent=1 // pred_check
      _
    $region15: #{tpu_custom_call.1} parent=1 // pred_check_branch
      %47 = sbr.rel (0) target = $region17
    $region16: #{tpu_custom_call.1} parent=1 // pred_region
      %49 = dma.done [#allocation4], 256
    $region17: #{tpu_custom_call.1} parent=1 // pred_fallthru
      _
    %50 = vsyncpa [#allocation3], 1
    %51 = vsyncpa [#allocation4], 1

</llo_original>
